<compile_context>
chip_gen: v7x
topology: tpu7x:2x2x1
jax: 0.10.0
libtpu: 0.0.40
codegen_flags: <defaults>
</compile_context>

<pallas_src>
import jax
import jax.numpy as jnp
from jax.experimental import pallas as pl
from jax.experimental.pallas import tpu as pltpu


def eot_matmul_kernel(x_ref, w_ref, b_ref, o_ref, acc_ref):
    # x_ref:   (TB, TK) bf16  -- gathered EOT-token embeddings (tile)
    # w_ref:   (TK, TN) bf16  -- stand-in encoder projection weight (tile)
    # b_ref:   (1,  TN) f32   -- bias (tile)
    # o_ref:   (TB, TN) f32   -- gelu(x @ W + b) (tile)
    # acc_ref: (TB, TN) f32   -- VMEM accumulator scratch
    k = pl.program_id(2)

    @pl.when(k == 0)
    def _():
        acc_ref[...] = jnp.zeros_like(acc_ref)

    acc_ref[...] += jnp.dot(x_ref[...], w_ref[...],
                            preferred_element_type=jnp.float32)

    @pl.when(k == pl.num_programs(2) - 1)
    def _():
        h = acc_ref[...] + b_ref[...]
        o_ref[...] = jax.nn.gelu(h).astype(o_ref.dtype)


def _round_up(x, m):
    return ((x + m - 1) // m) * m


def eot_text_encoder(input_ids, mask, embed_table, w, b, *, tb=128, tn=128, tk=128):
    """Pallas-backed forward. input_ids, mask: (B, S) int32. Returns (B, D) f32."""
    B, S = input_ids.shape
    D = embed_table.shape[1]

    # --- wrapper-side glue (trivial VPU work) -------------------------------
    # last_ones(mask): argmax over S of mask * arange(S).
    iota = jnp.arange(S, dtype=jnp.int32)[None, :]
    eot_inds = jnp.argmax(mask.astype(jnp.int32) * iota, axis=1)             # (B,)

    # Gather only the EOT token id per row, then its embedding -> (B, D).
    eot_ids = jnp.take_along_axis(input_ids, eot_inds[:, None], axis=1)[:, 0]
    x = jnp.take(embed_table, eot_ids, axis=0).astype(jnp.float32)            # (B, D)

    # --- pad to lane-dense tile multiples, cast matmul operands to bf16 -----
    B_pad = _round_up(max(B, tb), tb)
    D_pad = _round_up(max(D, max(tn, tk)), max(tn, tk))

    x_p = jnp.zeros((B_pad, D_pad), jnp.bfloat16).at[:B, :D].set(
        x.astype(jnp.bfloat16))
    w_p = jnp.zeros((D_pad, D_pad), jnp.bfloat16).at[:D, :D].set(
        w.astype(jnp.bfloat16))
    b_p = jnp.zeros((1, D_pad), jnp.float32).at[0, :D].set(
        b.astype(jnp.float32))

    grid = (B_pad // tb, D_pad // tn, D_pad // tk)

    out = pl.pallas_call(
        eot_matmul_kernel,
        out_shape=jax.ShapeDtypeStruct((B_pad, D_pad), jnp.float32),
        grid_spec=pltpu.PrefetchScalarGridSpec(
            num_scalar_prefetch=0,
            grid=grid,
            in_specs=[
                pl.BlockSpec((tb, tk), lambda i, j, k: (i, k)),   # x (EOT emb)
                pl.BlockSpec((tk, tn), lambda i, j, k: (k, j)),   # W
                pl.BlockSpec((1, tn), lambda i, j, k: (0, j)),    # b
            ],
            out_specs=pl.BlockSpec((tb, tn), lambda i, j, k: (i, j)),
            scratch_shapes=[pltpu.VMEM((tb, tn), jnp.float32)],
        ),
        compiler_params=pltpu.CompilerParams(
            dimension_semantics=("parallel", "parallel", "arbitrary")),
    )(x_p, w_p, b_p)

    return out[:B, :D]


def eot_text_encoder_ref(input_ids, mask, embed_table, w, b):
    """Pure-JAX f32 reference for verification (full-sequence form, as in the module)."""
    emb = jnp.take(embed_table, input_ids, axis=0).astype(jnp.float32)
    hidden = jax.nn.gelu(emb @ w.astype(jnp.float32) + b.astype(jnp.float32))
    S = mask.shape[1]
    eot_inds = jnp.argmax(
        mask.astype(jnp.int32) * jnp.arange(S, dtype=jnp.int32), axis=1)
    return hidden[jnp.arange(hidden.shape[0]), eot_inds]


if __name__ == "__main__":
    # Small, deterministic synthetic setup.
    B, S, D, VOCAB = 2, 8, 32, 64
    key = jax.random.PRNGKey(0)
    k_emb, k_w, k_b, k_ids = jax.random.split(key, 4)

    embed_table = jax.random.normal(k_emb, (VOCAB, D), dtype=jnp.float32) * 0.02
    w = jax.random.normal(k_w, (D, D), dtype=jnp.float32) * (1.0 / jnp.sqrt(D))
    b = jax.random.normal(k_b, (D,), dtype=jnp.float32) * 0.01

    input_ids = jax.random.randint(k_ids, (B, S), 0, VOCAB, dtype=jnp.int32)
    # Attention masks with different valid lengths (1s then padding 0s).
    lengths = jnp.array([6, 8], dtype=jnp.int32)
    mask = (jnp.arange(S, dtype=jnp.int32)[None, :] < lengths[:, None]).astype(jnp.int32)

    y = eot_text_encoder(input_ids, mask, embed_table, w, b)
    y = jax.block_until_ready(y)

    y_ref = eot_text_encoder_ref(input_ids, mask, embed_table, w, b)
    assert y.shape == (B, D)
    # bf16 matmul operands (f32 accumulation) -> loosen tolerance vs. f32 ref.
    assert jnp.allclose(y, y_ref, atol=5e-3, rtol=5e-2), "mismatch vs reference"

    print("KERNEL_OK")
</pallas_src>

<mosaic_0001>
module attributes {stable_mosaic.version = 11 : i64} {
  func.func @eot_matmul_kernel(%arg0: i32, %arg1: i32, %arg2: i32, %arg3: memref<128x128xbf16, #tpu.memory_space<vmem>>, %arg4: memref<128x128xbf16, #tpu.memory_space<vmem>>, %arg5: memref<1x128xf32, #tpu.memory_space<vmem>>, %arg6: memref<128x128xf32, #tpu.memory_space<vmem>>, %arg7: memref<128x128xf32, #tpu.memory_space<vmem>>) attributes {dimension_semantics = [#tpu.dimension_semantics<parallel>, #tpu.dimension_semantics<parallel>, #tpu.dimension_semantics<arbitrary>], iteration_bounds = array<i64: 1, 1, 1>, scalar_prefetch = 0 : i64, scratch_operands = 1 : i64, tpu.core_type = #tpu.core_type<tc>, window_params = [{transform_indices = @transform_0, window_bounds = array<i64: 128, 128>}, {transform_indices = @transform_1, window_bounds = array<i64: 128, 128>}, {transform_indices = @transform_2, window_bounds = array<i64: 1, 128>}, {transform_indices = @transform_3, window_bounds = array<i64: 128, 128>}]} {
    %c0_i32 = arith.constant 0 : i32
    %0 = arith.cmpi eq, %arg2, %c0_i32 : i32
    %1 = arith.extui %0 : i1 to i32
    %c0_i32_0 = arith.constant 0 : i32
    %2 = arith.cmpi ne, %1, %c0_i32_0 : i32
    scf.if %2 {
      %cst_10 = arith.constant 0.000000e+00 : f32
      %12 = vector.broadcast %cst_10 : f32 to vector<128x128xf32>
      %c0_11 = arith.constant 0 : index
      %c0_12 = arith.constant 0 : index
      %13 = vector.load %arg7[%c0_11, %c0_12] : memref<128x128xf32, #tpu.memory_space<vmem>>, vector<128x128xf32>
      tpu.vector_store %arg7[%c0_11, %c0_12], %12 {strides = array<i32>} : memref<128x128xf32, #tpu.memory_space<vmem>>, vector<128x128xf32>,
    } else {
    }
    %c0 = arith.constant 0 : index
    %c0_1 = arith.constant 0 : index
    %3 = vector.load %arg7[%c0, %c0_1] : memref<128x128xf32, #tpu.memory_space<vmem>>, vector<128x128xf32>
    %c0_2 = arith.constant 0 : index
    %c0_3 = arith.constant 0 : index
    %4 = vector.load %arg3[%c0_2, %c0_3] : memref<128x128xbf16, #tpu.memory_space<vmem>>, vector<128x128xbf16>
    %c0_4 = arith.constant 0 : index
    %c0_5 = arith.constant 0 : index
    %5 = vector.load %arg4[%c0_4, %c0_5] : memref<128x128xbf16, #tpu.memory_space<vmem>>, vector<128x128xbf16>
    %cst = arith.constant dense<0.000000e+00> : vector<128x128xf32>
    %6 = tpu.matmul %4, %5, %cst {dimension_numbers = #tpu.dot_dimension_numbers<[1], [0], [0], [1], [0, 0, 1, 1], [], []>} : vector<128x128xbf16>, vector<128x128xbf16>, vector<128x128xf32> -> vector<128x128xf32>
    %7 = arith.addf %3, %6 : vector<128x128xf32>
    %c0_6 = arith.constant 0 : index
    %c0_7 = arith.constant 0 : index
    %8 = vector.load %arg7[%c0_6, %c0_7] : memref<128x128xf32, #tpu.memory_space<vmem>>, vector<128x128xf32>
    tpu.vector_store %arg7[%c0_6, %c0_7], %7 {strides = array<i32>} : memref<128x128xf32, #tpu.memory_space<vmem>>, vector<128x128xf32>,
    %c0_i32_8 = arith.constant 0 : i32
    %9 = arith.cmpi eq, %arg2, %c0_i32_8 : i32
    %10 = arith.extui %9 : i1 to i32
    %c0_i32_9 = arith.constant 0 : i32
    %11 = arith.cmpi ne, %10, %c0_i32_9 : i32
    scf.if %11 {
      %c0_10 = arith.constant 0 : index
      %c0_11 = arith.constant 0 : index
      %12 = vector.load %arg7[%c0_10, %c0_11] : memref<128x128xf32, #tpu.memory_space<vmem>>, vector<128x128xf32>
      %c0_12 = arith.constant 0 : index
      %c0_13 = arith.constant 0 : index
      %13 = vector.load %arg5[%c0_12, %c0_13] : memref<1x128xf32, #tpu.memory_space<vmem>>, vector<1x128xf32>
      %14 = vector.broadcast %13 : vector<1x128xf32> to vector<128x128xf32>
      %15 = arith.addf %12, %14 : vector<128x128xf32>
      %16 = arith.mulf %15, %15 : vector<128x128xf32>
      %17 = arith.mulf %15, %16 : vector<128x128xf32>
      %cst_14 = arith.constant 4.471500e-02 : f32
      %18 = vector.broadcast %cst_14 : f32 to vector<128x128xf32>
      %19 = arith.mulf %18, %17 : vector<128x128xf32>
      %20 = arith.addf %15, %19 : vector<128x128xf32>
      %cst_15 = arith.constant 0.797884583 : f32
      %21 = vector.broadcast %cst_15 : f32 to vector<128x128xf32>
      %22 = arith.mulf %21, %20 : vector<128x128xf32>
      %23 = math.tanh %22 : vector<128x128xf32>
      %cst_16 = arith.constant 1.000000e+00 : f32
      %24 = vector.broadcast %cst_16 : f32 to vector<128x128xf32>
      %25 = arith.addf %24, %23 : vector<128x128xf32>
      %cst_17 = arith.constant 5.000000e-01 : f32
      %26 = vector.broadcast %cst_17 : f32 to vector<128x128xf32>
      %27 = arith.mulf %26, %25 : vector<128x128xf32>
      %28 = arith.mulf %15, %27 : vector<128x128xf32>
      %c0_18 = arith.constant 0 : index
      %c0_19 = arith.constant 0 : index
      %29 = vector.load %arg6[%c0_18, %c0_19] : memref<128x128xf32, #tpu.memory_space<vmem>>, vector<128x128xf32>
      tpu.vector_store %arg6[%c0_18, %c0_19], %28 {strides = array<i32>} : memref<128x128xf32, #tpu.memory_space<vmem>>, vector<128x128xf32>,
    } else {
    }
    return
  }
  func.func @transform_0(%arg0: i32, %arg1: i32, %arg2: i32) -> (i32, i32) {
    %c0_i32 = arith.constant 0 : i32
    return %arg0, %arg2 : i32, i32
  }
  func.func @transform_1(%arg0: i32, %arg1: i32, %arg2: i32) -> (i32, i32) {
    %c0_i32 = arith.constant 0 : i32
    return %arg2, %arg1 : i32, i32
  }
  func.func @transform_2(%arg0: i32, %arg1: i32, %arg2: i32) -> (i32, i32) {
    %c0_i32 = arith.constant 0 : i32
    %c0_i32_0 = arith.constant 0 : i32
    return %c0_i32, %arg1 : i32, i32
  }
  func.func @transform_3(%arg0: i32, %arg1: i32, %arg2: i32) -> (i32, i32) {
    %c0_i32 = arith.constant 0 : i32
    return %arg0, %arg1 : i32, i32
  }
}

</mosaic_0001>

<llo_original>
// kernel: tpu_custom_call.1
$region0: #{tpu_custom_call.1}
  #allocation0 [shape = 'u32[]', space=smem, size = 0x4, offset = 0x4, fixed_abs, tag = 'smem constant byte address 0x4 - core index']
  #allocation1 [shape = 'u32[144,128]{1,0:T(1,128)}', space=vmem, size = 0x12000, scoped, tag = 'internal scratch']
  #allocation2 [shape = 'f32[128,128]{1,0:T(8,128)}', space=vmem, size = 0x10000, scoped, tag = 'scratch operand']
  %s0 = inlined_call_operand.hbm [shape: bf16[128,128], index: 0, kind: input, shape index: {}]
  %s1 = inlined_call_operand.hbm [shape: bf16[128,128], index: 1, kind: input, shape index: {}]
  %s2 = inlined_call_operand.vmem [shape: f32[1,128], index: 2, kind: input, shape index: {}]
  %s3 = inlined_call_operand.hbm [shape: f32[128,128], index: 3, kind: output, shape index: {}]
  %s4 = sld [smem:[#allocation0]]
  $region38: #{tpu_custom_call.1} parent=0
    _
  %s6 = ssub.s32 1, %s4
  %s7 = scalar_select 0, %s6, %s4
  $region1: #{tpu_custom_call.1} parent=0
    #allocation3 [shape = 'u8[32768]{0}', space=vmem, size = 0x8000, scoped, tag = 'input window, operand 0, single buffered']
    #allocation4 [shape = 's32[1]{0}', space=sflag, size = 0x4, scoped, tag = 'scoped memory for tpu_custom_call.1']
    #allocation5 [shape = 's32[1]{0}', space=sflag, size = 0x4, scoped, tag = 'scoped memory for tpu_custom_call.1']
    #allocation6 [shape = 'u8[32768]{0}', space=vmem, size = 0x8000, scoped, tag = 'input window, operand 1, single buffered']
    #allocation7 [shape = 's32[1]{0}', space=sflag, size = 0x4, scoped, tag = 'scoped memory for tpu_custom_call.1']
    #allocation8 [shape = 'u8[65536]{0}', space=vmem, size = 0x10000, scoped, tag = 'output window, operand 0, single buffered']
    %8 = vsyncpa [#allocation4], 0
    %9 = vsyncpa [#allocation7], 0
    %10 = vsyncpa [#allocation5], 0
    // Predicated region
    $region2: #{tpu_custom_call.1} parent=1 // pred_check
      _
    $region3: #{tpu_custom_call.1} parent=1 // pred_check_branch
      %12 = sbr.rel (0) target = $region5
    $region4: #{tpu_custom_call.1} parent=1 // pred_region
      %s14 = ssub.s32 1024, 1024
      %15 = vsyncadd [#allocation4], %s14
      %s16 = sshll.u32 [#allocation3], 4
      %s17 = int_to_ptr.vmem [resolvable:$true] %s16
      %22 = dma.hbm_to_vmem [thread:$0]  %s0, 1024, %s17, [#allocation4], 64, 64, 4
    $region5: #{tpu_custom_call.1} parent=1 // pred_fallthru
      _
    // Predicated region
    $region6: #{tpu_custom_call.1} parent=1 // pred_check
      _
    $region7: #{tpu_custom_call.1} parent=1 // pred_check_branch
      %24 = sbr.rel (0) target = $region9
    $region8: #{tpu_custom_call.1} parent=1 // pred_region
      %s26 = ssub.s32 1024, 1024
      %27 = vsyncadd [#allocation7], %s26
      %s28 = sshll.u32 [#allocation6], 4
      %s29 = int_to_ptr.vmem [resolvable:$true] %s28
      %34 = dma.hbm_to_vmem [thread:$0]  %s1, 1024, %s29, [#allocation7], 64, 64, 4
    $region9: #{tpu_custom_call.1} parent=1 // pred_fallthru
      _
    // Predicated region
    $region10: #{tpu_custom_call.1} parent=1 // pred_check
      _
    $region11: #{tpu_custom_call.1} parent=1 // pred_check_branch
      %36 = sbr.rel (0) target = $region13
    $region12: #{tpu_custom_call.1} parent=1 // pred_region
      _
    $region13: #{tpu_custom_call.1} parent=1 // pred_fallthru
      _
    // Predicated region
    $region14: #{tpu_custom_call.1} parent=1 // pred_check
      _
    $region15: #{tpu_custom_call.1} parent=1 // pred_check_branch
      %38 = sbr.rel (0) target = $region17
    $region16: #{tpu_custom_call.1} parent=1 // pred_region
      %39 = dma.done [#allocation4], 1024
    $region17: #{tpu_custom_call.1} parent=1 // pred_fallthru
      _
    // Predicated region
    $region18: #{tpu_custom_call.1} parent=1 // pred_check
      _
    $region19: #{tpu_custom_call.1} parent=1 // pred_check_branch
      %41 = sbr.rel (0) target = $region21
    $region20: #{tpu_custom_call.1} parent=1 // pred_region
      %42 = dma.done [#allocation7], 1024
    $region21: #{tpu_custom_call.1} parent=1 // pred_fallthru
      _
    %p44 = scmp.eq.s32.totalorder 0, 0
    // Predicated region
    $region22: #{tpu_custom_call.1} parent=1 // pred_check
      %p45 = pneg %p44
    $region23: #{tpu_custom_call.1} parent=1 // pred_check_branch
      %47 = sbr.rel (%p45) target = $region25
    $region24: #{tpu_custom_call.1} parent=1 // pred_region
      %48 = vst [vmem:[#allocation2] sm:$0xff] 0.0
      %49 = vst [vmem:[#allocation2 + $0x8] sm:$0xff] 0.0
      %50 = vst [vmem:[#allocation2 + $0x10] sm:$0xff] 0.0
      %51 = vst [vmem:[#allocation2 + $0x18] sm:$0xff] 0.0
      %52 = vst [vmem:[#allocation2 + $0x20] sm:$0xff] 0.0
      %53 = vst [vmem:[#allocation2 + $0x28] sm:$0xff] 0.0
      %54 = vst [vmem:[#allocation2 + $0x30] sm:$0xff] 0.0
      %55 = vst [vmem:[#allocation2 + $0x38] sm:$0xff] 0.0
      %56 = vst [vmem:[#allocation2 + $0x40] sm:$0xff] 0.0
      %57 = vst [vmem:[#allocation2 + $0x48] sm:$0xff] 0.0
      %58 = vst [vmem:[#allocation2 + $0x50] sm:$0xff] 0.0
      %59 = vst [vmem:[#allocation2 + $0x58] sm:$0xff] 0.0
      %60 = vst [vmem:[#allocation2 + $0x60] sm:$0xff] 0.0
      %61 = vst [vmem:[#allocation2 + $0x68] sm:$0xff] 0.0
      %62 = vst [vmem:[#allocation2 + $0x70] sm:$0xff] 0.0
      %63 = vst [vmem:[#allocation2 + $0x78] sm:$0xff] 0.0
    $region25: #{tpu_custom_call.1} parent=1 // pred_fallthru
      _
    %v64 = vld [vmem:[#allocation2] sm:$0xff]
    %v65 = vld [vmem:[#allocation2 + $0x8] sm:$0xff]
    %v66 = vld [vmem:[#allocation2 + $0x10] sm:$0xff]
    %v67 = vld [vmem:[#allocation2 + $0x18] sm:$0xff]
    %v68 = vld [vmem:[#allocation2 + $0x20] sm:$0xff]
    %v69 = vld [vmem:[#allocation2 + $0x28] sm:$0xff]
    %v70 = vld [vmem:[#allocation2 + $0x30] sm:$0xff]
    %v71 = vld [vmem:[#allocation2 + $0x38] sm:$0xff]
    %v72 = vld [vmem:[#allocation2 + $0x40] sm:$0xff]
    %v73 = vld [vmem:[#allocation2 + $0x48] sm:$0xff]
    %v74 = vld [vmem:[#allocation2 + $0x50] sm:$0xff]
    %v75 = vld [vmem:[#allocation2 + $0x58] sm:$0xff]
    %v76 = vld [vmem:[#allocation2 + $0x60] sm:$0xff]
    %v77 = vld [vmem:[#allocation2 + $0x68] sm:$0xff]
    %v78 = vld [vmem:[#allocation2 + $0x70] sm:$0xff]
    %v79 = vld [vmem:[#allocation2 + $0x78] sm:$0xff]
    %v80 = vld [vmem:[#allocation3] sm:$0xf]
    %v81 = vld [vmem:[#allocation3 + $0x4] sm:$0xf]
    %v82 = vld [vmem:[#allocation3 + $0x8] sm:$0xf]
    %v83 = vld [vmem:[#allocation3 + $0xc] sm:$0xf]
    %v84 = vld [vmem:[#allocation3 + $0x10] sm:$0xf]
    %v85 = vld [vmem:[#allocation3 + $0x14] sm:$0xf]
    %v86 = vld [vmem:[#allocation3 + $0x18] sm:$0xf]
    %v87 = vld [vmem:[#allocation3 + $0x1c] sm:$0xf]
    %v88 = vld [vmem:[#allocation3 + $0x20] sm:$0xf]
    %v89 = vld [vmem:[#allocation3 + $0x24] sm:$0xf]
    %v90 = vld [vmem:[#allocation3 + $0x28] sm:$0xf]
    %v91 = vld [vmem:[#allocation3 + $0x2c] sm:$0xf]
    %v92 = vld [vmem:[#allocation3 + $0x30] sm:$0xf]
    %v93 = vld [vmem:[#allocation3 + $0x34] sm:$0xf]
    %v94 = vld [vmem:[#allocation3 + $0x38] sm:$0xf]
    %v95 = vld [vmem:[#allocation3 + $0x3c] sm:$0xf]
    %v96 = vld [vmem:[#allocation6] sm:$0xf]
    %v97 = vld [vmem:[#allocation6 + $0x4] sm:$0xf]
    %v98 = vld [vmem:[#allocation6 + $0x8] sm:$0xf]
    %v99 = vld [vmem:[#allocation6 + $0xc] sm:$0xf]
    %v100 = vld [vmem:[#allocation6 + $0x10] sm:$0xf]
    %v101 = vld [vmem:[#allocation6 + $0x14] sm:$0xf]
    %v102 = vld [vmem:[#allocation6 + $0x18] sm:$0xf]
    %v103 = vld [vmem:[#allocation6 + $0x1c] sm:$0xf]
    %v104 = vld [vmem:[#allocation6 + $0x20] sm:$0xf]
    %v105 = vld [vmem:[#allocation6 + $0x24] sm:$0xf]
    %v106 = vld [vmem:[#allocation6 + $0x28] sm:$0xf]
    %v107 = vld [vmem:[#allocation6 + $0x2c] sm:$0xf]
    %v108 = vld [vmem:[#allocation6 + $0x30] sm:$0xf]
    %v109 = vld [vmem:[#allocation6 + $0x34] sm:$0xf]
    %v110 = vld [vmem:[#allocation6 + $0x38] sm:$0xf]
    %v111 = vld [vmem:[#allocation6 + $0x3c] sm:$0xf]
    %v128 = vunpack.c.l.b16 %v80
    %v129 = vunpack.c.l.b16 %v81
    %v130 = vunpack.c.l.b16 %v82
    %v131 = vunpack.c.l.b16 %v83
    %v132 = vunpack.c.l.b16 %v84
    %v133 = vunpack.c.l.b16 %v85
    %v134 = vunpack.c.l.b16 %v86
    %v135 = vunpack.c.l.b16 %v87
    %v136 = vunpack.c.l.b16 %v88
    %v137 = vunpack.c.l.b16 %v89
    %v138 = vunpack.c.l.b16 %v90
    %v139 = vunpack.c.l.b16 %v91
    %v140 = vunpack.c.l.b16 %v92
    %v141 = vunpack.c.l.b16 %v93
    %v142 = vunpack.c.l.b16 %v94
    %v143 = vunpack.c.l.b16 %v95
    %v144 = vpack.c.b16 %v129, %v128
    %v145 = vpack.c.b16 %v131, %v130
    %v146 = vpack.c.b16 %v133, %v132
    %v147 = vpack.c.b16 %v135, %v134
    %v148 = vpack.c.b16 %v137, %v136
    %v149 = vpack.c.b16 %v139, %v138
    %v150 = vpack.c.b16 %v141, %v140
    %v151 = vpack.c.b16 %v143, %v142
    %v176 = vunpack.c.l.b16 %v96
    %v177 = vunpack.c.l.b16 %v97
    %v178 = vunpack.c.l.b16 %v98
    %v179 = vunpack.c.l.b16 %v99
    %v180 = vunpack.c.l.b16 %v100
    %v181 = vunpack.c.l.b16 %v101
    %v182 = vunpack.c.l.b16 %v102
    %v183 = vunpack.c.l.b16 %v103
    %v184 = vunpack.c.l.b16 %v104
    %v185 = vunpack.c.l.b16 %v105
    %v186 = vunpack.c.l.b16 %v106
    %v187 = vunpack.c.l.b16 %v107
    %v188 = vunpack.c.l.b16 %v108
    %v189 = vunpack.c.l.b16 %v109
    %v190 = vunpack.c.l.b16 %v110
    %v191 = vunpack.c.l.b16 %v111
    %v192 = vpack.c.b16 %v177, %v176
    %v193 = vpack.c.b16 %v179, %v178
    %v194 = vpack.c.b16 %v181, %v180
    %v195 = vpack.c.b16 %v183, %v182
    %v196 = vpack.c.b16 %v185, %v184
    %v197 = vpack.c.b16 %v187, %v186
    %v198 = vpack.c.b16 %v189, %v188
    %v199 = vpack.c.b16 %v191, %v190
    %208 = vmatprep.subr.bf16.mxu0 0
    %209 = vmatpush1.bf16.msra.mxu0 %v192
    %210 = vmatprep.subr.bf16.mxu0 0
    %211 = vmatpush1.bf16.msra.mxu0 %v193
    %212 = vmatprep.subr.bf16.mxu0 0
    %213 = vmatpush1.bf16.msra.mxu0 %v194
    %214 = vmatprep.subr.bf16.mxu0 0
    %215 = vmatpush1.bf16.msra.mxu0 %v195
    %216 = vmatprep.subr.bf16.mxu0 0
    %217 = vmatpush1.bf16.msra.mxu0 %v196
    %218 = vmatprep.subr.bf16.mxu0 0
    %219 = vmatpush1.bf16.msra.mxu0 %v197
    %220 = vmatprep.subr.bf16.mxu0 0
    %221 = vmatpush1.bf16.msra.mxu0 %v198
    %222 = vmatprep.subr.bf16.mxu0 0
    %223 = vmatpush1.bf16.msra.mxu0 %v199
    %224 = vmatprep.subr.bf16.mxu0 0
    %225 = vmatpush1.bf16.msra.mxu0 0
    %226 = vmatprep.subr.bf16.mxu0 0
    %227 = vmatpush1.bf16.msra.mxu0 0
    %228 = vmatprep.subr.bf16.mxu0 0
    %229 = vmatpush1.bf16.msra.mxu0 0
    %230 = vmatprep.subr.bf16.mxu0 0
    %231 = vmatpush1.bf16.msra.mxu0 0
    %232 = vmatprep.subr.bf16.mxu0 0
    %233 = vmatpush1.bf16.msra.mxu0 0
    %234 = vmatprep.subr.bf16.mxu0 0
    %235 = vmatpush1.bf16.msra.mxu0 0
    %236 = vmatprep.subr.bf16.mxu0 0
    %237 = vmatpush1.bf16.msra.mxu0 0
    %238 = vmatprep.subr.bf16.mxu0 0
    %239 = vmatpush1.bf16.msra.mxu0 0
    %240 = vmatprep.mubr.bf16.mxu0 0
    %241 = vmatmul.mubr.bf16.gmra.mrb[0].mxu0 %v144
    %v242 = vpop.f32.mrb[0].mxu0
    %v243 = vadd.f32 0.0, %v242
    %v244 = vpop.f32.mrb[0].mxu0
    %v245 = vpop.f32.mrb[0].mxu0
    %v246 = vadd.f32 0.0, %v245
    %v247 = vpop.f32.mrb[0].mxu0
    %248 = vmatprep.mubr.bf16.mxu0 0
    %249 = vmatmul.mubr.bf16.gmra.mrb[0].mxu0 %v145
    %v250 = vpop.f32.mrb[0].mxu0
    %v251 = vadd.f32 0.0, %v250
    %v252 = vpop.f32.mrb[0].mxu0
    %v253 = vpop.f32.mrb[0].mxu0
    %v254 = vadd.f32 0.0, %v253
    %v255 = vpop.f32.mrb[0].mxu0
    %256 = vmatprep.mubr.bf16.mxu0 0
    %257 = vmatmul.mubr.bf16.gmra.mrb[0].mxu0 %v146
    %v258 = vpop.f32.mrb[0].mxu0
    %v259 = vadd.f32 0.0, %v258
    %v260 = vpop.f32.mrb[0].mxu0
    %v261 = vpop.f32.mrb[0].mxu0
    %v262 = vadd.f32 0.0, %v261
    %v263 = vpop.f32.mrb[0].mxu0
    %264 = vmatprep.mubr.bf16.mxu0 0
    %265 = vmatmul.mubr.bf16.gmra.mrb[0].mxu0 %v147
    %v266 = vpop.f32.mrb[0].mxu0
    %v267 = vadd.f32 0.0, %v266
    %v268 = vpop.f32.mrb[0].mxu0
    %v269 = vpop.f32.mrb[0].mxu0
    %v270 = vadd.f32 0.0, %v269
    %v271 = vpop.f32.mrb[0].mxu0
    %272 = vmatprep.mubr.bf16.mxu0 0
    %273 = vmatmul.mubr.bf16.gmra.mrb[0].mxu0 %v148
    %v274 = vpop.f32.mrb[0].mxu0
    %v275 = vadd.f32 0.0, %v274
    %v276 = vpop.f32.mrb[0].mxu0
    %v277 = vpop.f32.mrb[0].mxu0
    %v278 = vadd.f32 0.0, %v277
    %v279 = vpop.f32.mrb[0].mxu0
    %280 = vmatprep.mubr.bf16.mxu0 0
    %281 = vmatmul.mubr.bf16.gmra.mrb[0].mxu0 %v149
    %v282 = vpop.f32.mrb[0].mxu0
    %v283 = vadd.f32 0.0, %v282
    %v284 = vpop.f32.mrb[0].mxu0
    %v285 = vpop.f32.mrb[0].mxu0
    %v286 = vadd.f32 0.0, %v285
    %v287 = vpop.f32.mrb[0].mxu0
    %288 = vmatprep.mubr.bf16.mxu0 0
    %289 = vmatmul.mubr.bf16.gmra.mrb[0].mxu0 %v150
    %v290 = vpop.f32.mrb[0].mxu0
    %v291 = vadd.f32 0.0, %v290
    %v292 = vpop.f32.mrb[0].mxu0
    %v293 = vpop.f32.mrb[0].mxu0
    %v294 = vadd.f32 0.0, %v293
    %v295 = vpop.f32.mrb[0].mxu0
    %296 = vmatprep.mubr.bf16.mxu0 0
    %297 = vmatmul.mubr.bf16.gmra.mrb[0].mxu0 %v151
    %v298 = vpop.f32.mrb[0].mxu0
    %v299 = vadd.f32 0.0, %v298
    %v300 = vpop.f32.mrb[0].mxu0
    %v301 = vpop.f32.mrb[0].mxu0
    %v302 = vadd.f32 0.0, %v301
    %v303 = vpop.f32.mrb[0].mxu0
    %304 = vdwg.mxu0
    %v305 = vadd.f32 %v64, %v243
    %v306 = vadd.f32 %v65, %v246
    %v307 = vadd.f32 %v66, %v251
    %v308 = vadd.f32 %v67, %v254
    %v309 = vadd.f32 %v68, %v259
    %v310 = vadd.f32 %v69, %v262
    %v311 = vadd.f32 %v70, %v267
    %v312 = vadd.f32 %v71, %v270
    %v313 = vadd.f32 %v72, %v275
    %v314 = vadd.f32 %v73, %v278
    %v315 = vadd.f32 %v74, %v283
    %v316 = vadd.f32 %v75, %v286
    %v317 = vadd.f32 %v76, %v291
    %v318 = vadd.f32 %v77, %v294
    %v319 = vadd.f32 %v78, %v299
    %v320 = vadd.f32 %v79, %v302
    %321 = vst [vmem:[#allocation2] sm:$0xff] %v305
    %322 = vst [vmem:[#allocation2 + $0x8] sm:$0xff] %v306
    %323 = vst [vmem:[#allocation2 + $0x10] sm:$0xff] %v307
    %324 = vst [vmem:[#allocation2 + $0x18] sm:$0xff] %v308
    %325 = vst [vmem:[#allocation2 + $0x20] sm:$0xff] %v309
    %326 = vst [vmem:[#allocation2 + $0x28] sm:$0xff] %v310
    %327 = vst [vmem:[#allocation2 + $0x30] sm:$0xff] %v311
    %328 = vst [vmem:[#allocation2 + $0x38] sm:$0xff] %v312
    %329 = vst [vmem:[#allocation2 + $0x40] sm:$0xff] %v313
    %330 = vst [vmem:[#allocation2 + $0x48] sm:$0xff] %v314
    %331 = vst [vmem:[#allocation2 + $0x50] sm:$0xff] %v315
    %332 = vst [vmem:[#allocation2 + $0x58] sm:$0xff] %v316
    %333 = vst [vmem:[#allocation2 + $0x60] sm:$0xff] %v317
    %334 = vst [vmem:[#allocation2 + $0x68] sm:$0xff] %v318
    %335 = vst [vmem:[#allocation2 + $0x70] sm:$0xff] %v319
    %336 = vst [vmem:[#allocation2 + $0x78] sm:$0xff] %v320
    // Predicated region
    $region26: #{tpu_custom_call.1} parent=1 // pred_check
      %p337 = pneg %p44
    $region27: #{tpu_custom_call.1} parent=1 // pred_check_branch
      %339 = sbr.rel (%p337) target = $region29
    $region28: #{tpu_custom_call.1} parent=1 // pred_region
      %v340 = vld [vmem:[#allocation2] sm:$0xff]
      %v341 = vld [vmem:[#allocation2 + $0x8] sm:$0xff]
      %v342 = vld [vmem:[#allocation2 + $0x10] sm:$0xff]
      %v343 = vld [vmem:[#allocation2 + $0x18] sm:$0xff]
      %v344 = vld [vmem:[#allocation2 + $0x20] sm:$0xff]
      %v345 = vld [vmem:[#allocation2 + $0x28] sm:$0xff]
      %v346 = vld [vmem:[#allocation2 + $0x30] sm:$0xff]
      %v347 = vld [vmem:[#allocation2 + $0x38] sm:$0xff]
      %v348 = vld [vmem:[#allocation2 + $0x40] sm:$0xff]
      %v349 = vld [vmem:[#allocation2 + $0x48] sm:$0xff]
      %v350 = vld [vmem:[#allocation2 + $0x50] sm:$0xff]
      %v351 = vld [vmem:[#allocation2 + $0x58] sm:$0xff]
      %v352 = vld [vmem:[#allocation2 + $0x60] sm:$0xff]
      %v353 = vld [vmem:[#allocation2 + $0x68] sm:$0xff]
      %v354 = vld [vmem:[#allocation2 + $0x70] sm:$0xff]
      %v355 = vld [vmem:[#allocation2 + $0x78] sm:$0xff]
      %v356 = vld [vmem:[%s2] sm:$0x1]
      %v358 = vlaneseq
      %v359 = vshrl.u32 %v358, 7
      %v360 = vsub.s32 0, %v359
      %v361 = vrot.slane %v356, %v360
      %v363 = vadd.f32 %v340, %v361
      %v364 = vadd.f32 %v341, %v361
      %v365 = vadd.f32 %v342, %v361
      %v366 = vadd.f32 %v343, %v361
      %v367 = vadd.f32 %v344, %v361
      %v368 = vadd.f32 %v345, %v361
      %v369 = vadd.f32 %v346, %v361
      %v370 = vadd.f32 %v347, %v361
      %v371 = vadd.f32 %v348, %v361
      %v372 = vadd.f32 %v349, %v361
      %v373 = vadd.f32 %v350, %v361
      %v374 = vadd.f32 %v351, %v361
      %v375 = vadd.f32 %v352, %v361
      %v376 = vadd.f32 %v353, %v361
      %v377 = vadd.f32 %v354, %v361
      %v378 = vadd.f32 %v355, %v361
      %v379 = vmul.f32 %v363, %v363
      %v380 = vmul.f32 %v364, %v364
      %v381 = vmul.f32 %v365, %v365
      %v382 = vmul.f32 %v366, %v366
      %v383 = vmul.f32 %v367, %v367
      %v384 = vmul.f32 %v368, %v368
      %v385 = vmul.f32 %v369, %v369
      %v386 = vmul.f32 %v370, %v370
      %v387 = vmul.f32 %v371, %v371
      %v388 = vmul.f32 %v372, %v372
      %v389 = vmul.f32 %v373, %v373
      %v390 = vmul.f32 %v374, %v374
      %v391 = vmul.f32 %v375, %v375
      %v392 = vmul.f32 %v376, %v376
      %v393 = vmul.f32 %v377, %v377
      %v394 = vmul.f32 %v378, %v378
      %v395 = vmul.f32 %v363, %v379
      %v396 = vmul.f32 %v364, %v380
      %v397 = vmul.f32 %v365, %v381
      %v398 = vmul.f32 %v366, %v382
      %v399 = vmul.f32 %v367, %v383
      %v400 = vmul.f32 %v368, %v384
      %v401 = vmul.f32 %v369, %v385
      %v402 = vmul.f32 %v370, %v386
      %v403 = vmul.f32 %v371, %v387
      %v404 = vmul.f32 %v372, %v388
      %v405 = vmul.f32 %v373, %v389
      %v406 = vmul.f32 %v374, %v390
      %v407 = vmul.f32 %v375, %v391
      %v408 = vmul.f32 %v376, %v392
      %v409 = vmul.f32 %v377, %v393
      %v410 = vmul.f32 %v378, %v394
      %v411 = vmul.f32 %v395, 0.044715
      %v412 = vmul.f32 %v396, 0.044715
      %v413 = vmul.f32 %v397, 0.044715
      %v414 = vmul.f32 %v398, 0.044715
      %v415 = vmul.f32 %v399, 0.044715
      %v416 = vmul.f32 %v400, 0.044715
      %v417 = vmul.f32 %v401, 0.044715
      %v418 = vmul.f32 %v402, 0.044715
      %v419 = vmul.f32 %v403, 0.044715
      %v420 = vmul.f32 %v404, 0.044715
      %v421 = vmul.f32 %v405, 0.044715
      %v422 = vmul.f32 %v406, 0.044715
      %v423 = vmul.f32 %v407, 0.044715
      %v424 = vmul.f32 %v408, 0.044715
      %v425 = vmul.f32 %v409, 0.044715
      %v426 = vmul.f32 %v410, 0.044715
      %v427 = vadd.f32 %v363, %v411
      %v428 = vadd.f32 %v364, %v412
      %v429 = vadd.f32 %v365, %v413
      %v430 = vadd.f32 %v366, %v414
      %v431 = vadd.f32 %v367, %v415
      %v432 = vadd.f32 %v368, %v416
      %v433 = vadd.f32 %v369, %v417
      %v434 = vadd.f32 %v370, %v418
      %v435 = vadd.f32 %v371, %v419
      %v436 = vadd.f32 %v372, %v420
      %v437 = vadd.f32 %v373, %v421
      %v438 = vadd.f32 %v374, %v422
      %v439 = vadd.f32 %v375, %v423
      %v440 = vadd.f32 %v376, %v424
      %v441 = vadd.f32 %v377, %v425
      %v442 = vadd.f32 %v378, %v426
      %v443 = vmul.f32 %v427, 0.7978846
      %v444 = vmul.f32 %v428, 0.7978846
      %v445 = vmul.f32 %v429, 0.7978846
      %v446 = vmul.f32 %v430, 0.7978846
      %v447 = vmul.f32 %v431, 0.7978846
      %v448 = vmul.f32 %v432, 0.7978846
      %v449 = vmul.f32 %v433, 0.7978846
      %v450 = vmul.f32 %v434, 0.7978846
      %v451 = vmul.f32 %v435, 0.7978846
      %v452 = vmul.f32 %v436, 0.7978846
      %v453 = vmul.f32 %v437, 0.7978846
      %v454 = vmul.f32 %v438, 0.7978846
      %v455 = vmul.f32 %v439, 0.7978846
      %v456 = vmul.f32 %v440, 0.7978846
      %v457 = vmul.f32 %v441, 0.7978846
      %v458 = vmul.f32 %v442, 0.7978846
      %v459 = vtanh.pop %v443
      %v460 = vtanh.pop %v444
      %v461 = vtanh.pop %v445
      %v462 = vtanh.pop %v446
      %v463 = vtanh.pop %v447
      %v464 = vtanh.pop %v448
      %v465 = vtanh.pop %v449
      %v466 = vtanh.pop %v450
      %v467 = vtanh.pop %v451
      %v468 = vtanh.pop %v452
      %v469 = vtanh.pop %v453
      %v470 = vtanh.pop %v454
      %v471 = vtanh.pop %v455
      %v472 = vtanh.pop %v456
      %v473 = vtanh.pop %v457
      %v474 = vtanh.pop %v458
      %v475 = vadd.f32 %v459, 1.0
      %v476 = vadd.f32 %v460, 1.0
      %v477 = vadd.f32 %v461, 1.0
      %v478 = vadd.f32 %v462, 1.0
      %v479 = vadd.f32 %v463, 1.0
      %v480 = vadd.f32 %v464, 1.0
      %v481 = vadd.f32 %v465, 1.0
      %v482 = vadd.f32 %v466, 1.0
      %v483 = vadd.f32 %v467, 1.0
      %v484 = vadd.f32 %v468, 1.0
      %v485 = vadd.f32 %v469, 1.0
      %v486 = vadd.f32 %v470, 1.0
      %v487 = vadd.f32 %v471, 1.0
      %v488 = vadd.f32 %v472, 1.0
      %v489 = vadd.f32 %v473, 1.0
      %v490 = vadd.f32 %v474, 1.0
      %v491 = vmul.f32 %v475, 0.5
      %v492 = vmul.f32 %v476, 0.5
      %v493 = vmul.f32 %v477, 0.5
      %v494 = vmul.f32 %v478, 0.5
      %v495 = vmul.f32 %v479, 0.5
      %v496 = vmul.f32 %v480, 0.5
      %v497 = vmul.f32 %v481, 0.5
      %v498 = vmul.f32 %v482, 0.5
      %v499 = vmul.f32 %v483, 0.5
      %v500 = vmul.f32 %v484, 0.5
      %v501 = vmul.f32 %v485, 0.5
      %v502 = vmul.f32 %v486, 0.5
      %v503 = vmul.f32 %v487, 0.5
      %v504 = vmul.f32 %v488, 0.5
      %v505 = vmul.f32 %v489, 0.5
      %v506 = vmul.f32 %v490, 0.5
      %v507 = vmul.f32 %v363, %v491
      %v508 = vmul.f32 %v364, %v492
      %v509 = vmul.f32 %v365, %v493
      %v510 = vmul.f32 %v366, %v494
      %v511 = vmul.f32 %v367, %v495
      %v512 = vmul.f32 %v368, %v496
      %v513 = vmul.f32 %v369, %v497
      %v514 = vmul.f32 %v370, %v498
      %v515 = vmul.f32 %v371, %v499
      %v516 = vmul.f32 %v372, %v500
      %v517 = vmul.f32 %v373, %v501
      %v518 = vmul.f32 %v374, %v502
      %v519 = vmul.f32 %v375, %v503
      %v520 = vmul.f32 %v376, %v504
      %v521 = vmul.f32 %v377, %v505
      %v522 = vmul.f32 %v378, %v506
      %523 = vst [vmem:[#allocation8] sm:$0xff] %v507
      %524 = vst [vmem:[#allocation8 + $0x8] sm:$0xff] %v508
      %525 = vst [vmem:[#allocation8 + $0x10] sm:$0xff] %v509
      %526 = vst [vmem:[#allocation8 + $0x18] sm:$0xff] %v510
      %527 = vst [vmem:[#allocation8 + $0x20] sm:$0xff] %v511
      %528 = vst [vmem:[#allocation8 + $0x28] sm:$0xff] %v512
      %529 = vst [vmem:[#allocation8 + $0x30] sm:$0xff] %v513
      %530 = vst [vmem:[#allocation8 + $0x38] sm:$0xff] %v514
      %531 = vst [vmem:[#allocation8 + $0x40] sm:$0xff] %v515
      %532 = vst [vmem:[#allocation8 + $0x48] sm:$0xff] %v516
      %533 = vst [vmem:[#allocation8 + $0x50] sm:$0xff] %v517
      %534 = vst [vmem:[#allocation8 + $0x58] sm:$0xff] %v518
      %535 = vst [vmem:[#allocation8 + $0x60] sm:$0xff] %v519
      %536 = vst [vmem:[#allocation8 + $0x68] sm:$0xff] %v520
      %537 = vst [vmem:[#allocation8 + $0x70] sm:$0xff] %v521
      %538 = vst [vmem:[#allocation8 + $0x78] sm:$0xff] %v522
    $region29: #{tpu_custom_call.1} parent=1 // pred_fallthru
      _
    // Predicated region
    $region30: #{tpu_custom_call.1} parent=1 // pred_check
      _
    $region31: #{tpu_custom_call.1} parent=1 // pred_check_branch
      %540 = sbr.rel (0) target = $region33
    $region32: #{tpu_custom_call.1} parent=1 // pred_region
      %s542 = ssub.s32 2048, 2048
      %543 = vsyncadd [#allocation5], %s542
      %s544 = sshll.u32 [#allocation8], 4
      %s545 = int_to_ptr.vmem [resolvable:$true] %s544
      %550 = dma.vmem_to_hbm [thread:$0]  %s545, 2048, %s3, [#allocation5], 128, 128, 8
    $region33: #{tpu_custom_call.1} parent=1 // pred_fallthru
      _
    // Predicated region
    $region34: #{tpu_custom_call.1} parent=1 // pred_check
      _
    $region35: #{tpu_custom_call.1} parent=1 // pred_check_branch
      %552 = sbr.rel (0) target = $region37
    $region36: #{tpu_custom_call.1} parent=1 // pred_region
      %553 = dma.done [#allocation5], 2048
    $region37: #{tpu_custom_call.1} parent=1 // pred_fallthru
      _
    %554 = vsyncpa [#allocation4], 1
    %555 = vsyncpa [#allocation7], 1
    %556 = vsyncpa [#allocation5], 1

</llo_original>
